<compile_context>
chip_gen: v6e
topology: v6e:2x2x1
jax: 0.10.0
libtpu: 0.0.40
codegen_flags: <defaults>
</compile_context>

<pallas_src>
import jax
import jax.numpy as jnp
from jax import lax
from jax.experimental import pallas as pl
from jax.experimental.pallas import tpu as pltpu

_MIB = 1024 * 1024


def _round_up(x, m):
    return (x + m - 1) // m * m


def _largest_dividing_tile(padded_dim, candidates):
    for c in candidates:
        if padded_dim % c == 0:
            return c
    return candidates[-1]


def _device_kind():
    try:
        return jax.devices()[0].device_kind.lower()
    except Exception:
        return ""


# ---------------------------------------------------------------------------
# Kernels.  Grid = (M tiles, N tiles, K tiles); K (reduction) is the last axis.
#   x_ref: (TM, TK)   activations
#   w_ref: (TN, TK)   weight, torch-native (OUT, IN) layout (no transpose)
#   b_ref: (1,  TN)   bias (f32)
#   o_ref: (TM, TN)   output tile (resident across the K axis)
# ---------------------------------------------------------------------------

_CONTRACT_LAST = (((1,), (1,)), ((), ()))  # x @ w.T without materializing w.T


def _hidden_layer_kernel_f32out(x_ref, w_ref, b_ref, o_ref):
    """f32 output: accumulate directly into o_ref (no scratch, no zero-fill)."""
    k = pl.program_id(2)
    acc = lax.dot_general(
        x_ref[...], w_ref[...],
        dimension_numbers=_CONTRACT_LAST,
        preferred_element_type=jnp.float32,
    )

    @pl.when(k == 0)
    def _():
        o_ref[...] = acc

    @pl.when(k != 0)
    def _():
        o_ref[...] += acc

    @pl.when(k == pl.num_programs(2) - 1)
    def _():
        # Bias + ReLU fused only in the epilogue (not in the steady-state K loop).
        o_ref[...] = jnp.maximum(o_ref[...] + b_ref[...], 0.0)


def _hidden_layer_kernel_accum(x_ref, w_ref, b_ref, o_ref, acc_ref):
    """Non-f32 output: keep an f32 VMEM accumulator, cast once in the epilogue."""
    k = pl.program_id(2)
    acc = lax.dot_general(
        x_ref[...], w_ref[...],
        dimension_numbers=_CONTRACT_LAST,
        preferred_element_type=jnp.float32,
    )

    @pl.when(k == 0)
    def _():
        acc_ref[...] = acc

    @pl.when(k != 0)
    def _():
        acc_ref[...] += acc

    @pl.when(k == pl.num_programs(2) - 1)
    def _():
        o_ref[...] = jnp.maximum(acc_ref[...] + b_ref[...], 0.0).astype(o_ref.dtype)


# ---------------------------------------------------------------------------
# Wrapper
# ---------------------------------------------------------------------------

def make_hidden_layer(w, b, *, use_bf16_matmul=None, weight_buffers=2):
    """Build apply(x) = relu(x @ w.T + b), w in torch (OUT, IN) layout.

    Weight padding / casting happens once here (amortized across calls); the
    returned apply(x) only pads/casts the activations.
    """
    OUT, IN = w.shape
    assert b.shape == (OUT,)

    kind = _device_kind()
    if use_bf16_matmul is None:
        # bf16 operands (f32 accumulation) by default on v6e / v7x.
        use_bf16_matmul = ("v6" in kind) or ("v7" in kind)
    # v7x: 64 MiB VMEM per TensorCore -> cap at 48 MiB; v5e/v6e: 128 MiB -> 96 MiB.
    vmem_budget = 48 * _MIB if ("v7" in kind or not kind) else 96 * _MIB

    compute_dtype = jnp.bfloat16 if use_bf16_matmul else None

    # --- static (per-layer) tiling of N (=OUT) and K (=IN) ------------------
    Np = _round_up(OUT, 128)
    Kp = _round_up(IN, 128)
    TN = _largest_dividing_tile(Np, (512, 256, 128))
    TK = _largest_dividing_tile(Kp, (1024, 512, 256, 128))
    # Prefer >= 2 N tiles (both v7x TensorCores get work even with one M tile),
    # but never drop below 256-wide tiles (v6e/v7x MXU is 256x256).
    if Np // TN < 2:
        for cand in (512, 256):
            if Np % cand == 0 and Np // cand >= 2:
                TN = cand
                break

    # Pad / cast the torch-native (OUT, IN) weight ONCE -- no per-call passes.
    w_dtype = compute_dtype or w.dtype
    w_p = w.astype(w_dtype) if w.dtype != w_dtype else w
    if (Np, Kp) != (OUT, IN):
        w_p = jnp.pad(w_p, ((0, Np - OUT), (0, Kp - IN)))
    b_p = b.astype(jnp.float32)
    if Np != OUT:
        b_p = jnp.pad(b_p, (0, Np - OUT))
    b_p = b_p.reshape(1, Np)

    def apply(x):
        B, in_dim = x.shape
        assert in_dim == IN
        x_dtype = compute_dtype or x.dtype
        out_dtype = x.dtype
        in_bytes = jnp.dtype(x_dtype).itemsize
        out_bytes = jnp.dtype(out_dtype).itemsize
        needs_scratch = out_dtype != jnp.float32

        # --- M tiling: single M tile for small/medium batch => weights are
        # streamed from HBM exactly once (HBM weight traffic = Mp/TM * |W|). --
        sub = 16 if x_dtype == jnp.bfloat16 else 8
        Mp = _round_up(B, sub)
        if Mp <= 1024:
            TM = Mp
        else:
            TM = 512
            Mp = _round_up(B, TM)

        # --- keep double-buffered blocks inside the generation VMEM budget --
        def est(tm, tk_):
            e = 2 * tm * tk_ * in_bytes                         # x (2 bufs)
            e += max(2, weight_buffers) * TN * tk_ * in_bytes   # w
            e += 2 * tm * TN * out_bytes                        # out block
            e += 2 * TN * 4                                     # bias
            if needs_scratch:
                e += tm * TN * 4
            return e

        tk = TK
        while est(TM, tk) > vmem_budget and tk > 128:
            tk //= 2
        while est(TM, tk) > vmem_budget and TM > 256:
            TM = _round_up((TM + 1) // 2, sub)
            Mp = _round_up(B, TM)

        # --- activations: cast/pad only if actually needed -------------------
        x_in = x.astype(x_dtype) if x.dtype != x_dtype else x
        if (Mp, Kp) != (B, IN):
            x_in = jnp.pad(x_in, ((0, Mp - B), (0, Kp - IN)))

        grid = (Mp // TM, Np // TN, Kp // tk)

        w_spec_kwargs = {}
        if weight_buffers > 2:
            # Deeper weight pipelining (useful on v5e if the weight DMA is the
            # exposed critical path).
            w_spec_kwargs["pipeline_mode"] = pl.Buffered(weight_buffers)
        in_specs = [
            pl.BlockSpec((TM, tk), lambda i, j, k: (i, k)),                   # x
            pl.BlockSpec((TN, tk), lambda i, j, k: (j, k), **w_spec_kwargs),  # w
            pl.BlockSpec((1, TN), lambda i, j, k: (0, j)),                    # bias
        ]

        if needs_scratch:
            kernel = _hidden_layer_kernel_accum
            scratch = [pltpu.VMEM((TM, TN), jnp.float32)]
        else:
            kernel = _hidden_layer_kernel_f32out
            scratch = []

        out_p = pl.pallas_call(
            kernel,
            out_shape=jax.ShapeDtypeStruct((Mp, Np), out_dtype),
            grid_spec=pltpu.PrefetchScalarGridSpec(
                num_scalar_prefetch=0,
                grid=grid,
                in_specs=in_specs,
                out_specs=pl.BlockSpec((TM, TN), lambda i, j, k: (i, j)),
                scratch_shapes=scratch,
            ),
            compiler_params=pltpu.CompilerParams(
                # M/N independent -> shard across TensorCores; K is the reduction.
                dimension_semantics=("parallel", "parallel", "arbitrary"),
                vmem_limit_bytes=vmem_budget,
            ),
        )(x_in, w_p, b_p)

        if (Mp, Np) != (B, OUT):
            out_p = out_p[:B, :OUT]
        return out_p

    return apply


def hidden_layer(x, w, b, **kwargs):
    """One-shot convenience wrapper: relu(x @ w.T + b)."""
    return make_hidden_layer(w, b, **kwargs)(x)


if __name__ == "__main__":
    key = jax.random.PRNGKey(0)
    k_x, k_w, k_b = jax.random.split(key, 3)

    batch = 8
    input_size = 32
    output_size = 64

    # Deterministic parameter init (mimics torch.nn.Linear uniform init bound).
    bound = 1.0 / (input_size ** 0.5)
    w = jax.random.uniform(k_w, (output_size, input_size),
                           minval=-bound, maxval=bound, dtype=jnp.float32)
    b = jax.random.uniform(k_b, (output_size,),
                           minval=-bound, maxval=bound, dtype=jnp.float32)
    x = jax.random.normal(k_x, (batch, input_size), dtype=jnp.float32)

    # Reference in plain JAX (torch semantics: relu(x @ W.T + b)).
    ref = jnp.maximum(x @ w.T + b, 0.0)

    # 1) Exact f32 path.
    layer_f32 = make_hidden_layer(w, b, use_bf16_matmul=False)
    out = jax.block_until_ready(layer_f32(x))
    assert out.shape == (batch, output_size)
    assert jnp.allclose(out, ref, atol=1e-5, rtol=1e-5), "f32 mismatch vs reference"

    # 2) Default (auto) path: bf16 MXU operands on v6e/v7x, f32 elsewhere.
    layer_auto = make_hidden_layer(w, b)
    out2 = jax.block_until_ready(layer_auto(x))
    assert out2.shape == (batch, output_size)
    assert jnp.allclose(out2, ref, atol=5e-2, rtol=5e-2), "auto-path mismatch vs reference"

    print("KERNEL_OK")
</pallas_src>

<mosaic_0001>
module attributes {stable_mosaic.version = 11 : i64} {
  func.func @_hidden_layer_kernel_f32out(%arg0: i32, %arg1: i32, %arg2: i32, %arg3: memref<8x128xf32, #tpu.memory_space<vmem>>, %arg4: memref<128x128xf32, #tpu.memory_space<vmem>>, %arg5: memref<1x128xf32, #tpu.memory_space<vmem>>, %arg6: memref<8x128xf32, #tpu.memory_space<vmem>>) attributes {dimension_semantics = [#tpu.dimension_semantics<parallel>, #tpu.dimension_semantics<parallel>, #tpu.dimension_semantics<arbitrary>], iteration_bounds = array<i64: 1, 1, 1>, scalar_prefetch = 0 : i64, scratch_operands = 0 : i64, tpu.core_type = #tpu.core_type<tc>, window_params = [{transform_indices = @transform_0, window_bounds = array<i64: 8, 128>}, {transform_indices = @transform_1, window_bounds = array<i64: 128, 128>}, {transform_indices = @transform_2, window_bounds = array<i64: 1, 128>}, {transform_indices = @transform_3, window_bounds = array<i64: 8, 128>}]} {
    %c0 = arith.constant 0 : index
    %c0_0 = arith.constant 0 : index
    %0 = vector.load %arg3[%c0, %c0_0] : memref<8x128xf32, #tpu.memory_space<vmem>>, vector<8x128xf32>
    %c0_1 = arith.constant 0 : index
    %c0_2 = arith.constant 0 : index
    %1 = vector.load %arg4[%c0_1, %c0_2] : memref<128x128xf32, #tpu.memory_space<vmem>>, vector<128x128xf32>
    %cst = arith.constant dense<0.000000e+00> : vector<8x128xf32>
    %2 = tpu.matmul %0, %1, %cst {dimension_numbers = #tpu.dot_dimension_numbers<[1], [1], [0], [0], [0, 0, 1, 0], [], []>} : vector<8x128xf32>, vector<128x128xf32>, vector<8x128xf32> -> vector<8x128xf32>
    %c0_i32 = arith.constant 0 : i32
    %3 = arith.cmpi eq, %arg2, %c0_i32 : i32
    %4 = arith.extui %3 : i1 to i32
    %c0_i32_3 = arith.constant 0 : i32
    %5 = arith.cmpi ne, %4, %c0_i32_3 : i32
    scf.if %5 {
      %c0_8 = arith.constant 0 : index
      %c0_9 = arith.constant 0 : index
      %12 = vector.load %arg6[%c0_8, %c0_9] : memref<8x128xf32, #tpu.memory_space<vmem>>, vector<8x128xf32>
      tpu.vector_store %arg6[%c0_8, %c0_9], %2 {strides = array<i32>} : memref<8x128xf32, #tpu.memory_space<vmem>>, vector<8x128xf32>,
    } else {
    }
    %c0_i32_4 = arith.constant 0 : i32
    %6 = arith.cmpi ne, %arg2, %c0_i32_4 : i32
    %7 = arith.extui %6 : i1 to i32
    %c0_i32_5 = arith.constant 0 : i32
    %8 = arith.cmpi ne, %7, %c0_i32_5 : i32
    scf.if %8 {
      %c0_8 = arith.constant 0 : index
      %c0_9 = arith.constant 0 : index
      %12 = vector.load %arg6[%c0_8, %c0_9] : memref<8x128xf32, #tpu.memory_space<vmem>>, vector<8x128xf32>
      %13 = arith.addf %12, %2 : vector<8x128xf32>
      %c0_10 = arith.constant 0 : index
      %c0_11 = arith.constant 0 : index
      %14 = vector.load %arg6[%c0_10, %c0_11] : memref<8x128xf32, #tpu.memory_space<vmem>>, vector<8x128xf32>
      tpu.vector_store %arg6[%c0_10, %c0_11], %13 {strides = array<i32>} : memref<8x128xf32, #tpu.memory_space<vmem>>, vector<8x128xf32>,
    } else {
    }
    %c0_i32_6 = arith.constant 0 : i32
    %9 = arith.cmpi eq, %arg2, %c0_i32_6 : i32
    %10 = arith.extui %9 : i1 to i32
    %c0_i32_7 = arith.constant 0 : i32
    %11 = arith.cmpi ne, %10, %c0_i32_7 : i32
    scf.if %11 {
      %c0_8 = arith.constant 0 : index
      %c0_9 = arith.constant 0 : index
      %12 = vector.load %arg6[%c0_8, %c0_9] : memref<8x128xf32, #tpu.memory_space<vmem>>, vector<8x128xf32>
      %c0_10 = arith.constant 0 : index
      %c0_11 = arith.constant 0 : index
      %13 = vector.load %arg5[%c0_10, %c0_11] : memref<1x128xf32, #tpu.memory_space<vmem>>, vector<1x128xf32>
      %14 = vector.broadcast %13 : vector<1x128xf32> to vector<8x128xf32>
      %15 = arith.addf %12, %14 : vector<8x128xf32>
      %cst_12 = arith.constant 0.000000e+00 : f32
      %16 = vector.broadcast %cst_12 : f32 to vector<8x128xf32>
      %17 = arith.maximumf %15, %16 : vector<8x128xf32>
      %c0_13 = arith.constant 0 : index
      %c0_14 = arith.constant 0 : index
      %18 = vector.load %arg6[%c0_13, %c0_14] : memref<8x128xf32, #tpu.memory_space<vmem>>, vector<8x128xf32>
      tpu.vector_store %arg6[%c0_13, %c0_14], %17 {strides = array<i32>} : memref<8x128xf32, #tpu.memory_space<vmem>>, vector<8x128xf32>,
    } else {
    }
    return
  }
  func.func @transform_0(%arg0: i32, %arg1: i32, %arg2: i32) -> (i32, i32) {
    %c0_i32 = arith.constant 0 : i32
    return %arg0, %arg2 : i32, i32
  }
  func.func @transform_1(%arg0: i32, %arg1: i32, %arg2: i32) -> (i32, i32) {
    %c0_i32 = arith.constant 0 : i32
    return %arg1, %arg2 : i32, i32
  }
  func.func @transform_2(%arg0: i32, %arg1: i32, %arg2: i32) -> (i32, i32) {
    %c0_i32 = arith.constant 0 : i32
    %c0_i32_0 = arith.constant 0 : i32
    return %c0_i32, %arg1 : i32, i32
  }
  func.func @transform_3(%arg0: i32, %arg1: i32, %arg2: i32) -> (i32, i32) {
    %c0_i32 = arith.constant 0 : i32
    return %arg0, %arg1 : i32, i32
  }
}

</mosaic_0001>

<llo_original>
// kernel: tpu_custom_call.1
$region0: #{tpu_custom_call.1}
  #allocation0 [shape = 'u32[]', space=smem, size = 0x4, offset = 0x4, fixed_abs, tag = 'smem constant byte address 0x4 - core index']
  #allocation1 [shape = 'u32[144,128]{1,0:T(1,128)}', space=vmem, size = 0x12000, scoped, tag = 'internal scratch']
  %s0 = inlined_call_operand.hbm [shape: f32[8,128], index: 0, kind: input, shape index: {}]
  %s1 = inlined_call_operand.hbm [shape: f32[128,128], index: 1, kind: input, shape index: {}]
  %s2 = inlined_call_operand.vmem [shape: f32[1,128], index: 2, kind: input, shape index: {}]
  %s3 = inlined_call_operand.hbm [shape: f32[8,128], index: 3, kind: output, shape index: {}]
  %s4 = sld [smem:[#allocation0]]
  $region42: #{tpu_custom_call.1} parent=0
    _
  %s6 = ssub.s32 1, %s4
  %s7 = scalar_select 0, %s6, %s4
  $region1: #{tpu_custom_call.1} parent=0
    #allocation2 [shape = 'u8[4096]{0}', space=vmem, size = 0x1000, scoped, tag = 'input window, operand 0, single buffered']
    #allocation3 [shape = 's32[1]{0}', space=sflag, size = 0x4, scoped, tag = 'scoped memory for tpu_custom_call.1']
    #allocation4 [shape = 's32[1]{0}', space=sflag, size = 0x4, scoped, tag = 'scoped memory for tpu_custom_call.1']
    #allocation5 [shape = 'u8[65536]{0}', space=vmem, size = 0x10000, scoped, tag = 'input window, operand 1, single buffered']
    #allocation6 [shape = 's32[1]{0}', space=sflag, size = 0x4, scoped, tag = 'scoped memory for tpu_custom_call.1']
    #allocation7 [shape = 'u8[4096]{0}', space=vmem, size = 0x1000, scoped, tag = 'output window, operand 0, single buffered']
    %8 = vsyncpa [#allocation3], 0
    %9 = vsyncpa [#allocation6], 0
    %10 = vsyncpa [#allocation4], 0
    // Predicated region
    $region2: #{tpu_custom_call.1} parent=1 // pred_check
      _
    $region3: #{tpu_custom_call.1} parent=1 // pred_check_branch
      %12 = sbr.rel (0) target = $region5
    $region4: #{tpu_custom_call.1} parent=1 // pred_region
      %s14 = ssub.s32 128, 128
      %15 = vsyncadd [#allocation3], %s14
      %s17 = sshll.u32 [#allocation2], 4
      %s18 = int_to_ptr.vmem [resolvable:$true] %s17
      %20 = dma.hbm_to_vmem [thread:$0]  %s0, 128, %s18, [#allocation3]
    $region5: #{tpu_custom_call.1} parent=1 // pred_fallthru
      _
    // Predicated region
    $region6: #{tpu_custom_call.1} parent=1 // pred_check
      _
    $region7: #{tpu_custom_call.1} parent=1 // pred_check_branch
      %22 = sbr.rel (0) target = $region9
    $region8: #{tpu_custom_call.1} parent=1 // pred_region
      %s24 = ssub.s32 2048, 2048
      %25 = vsyncadd [#allocation6], %s24
      %s26 = sshll.u32 [#allocation5], 4
      %s27 = int_to_ptr.vmem [resolvable:$true] %s26
      %32 = dma.hbm_to_vmem [thread:$0]  %s1, 2048, %s27, [#allocation6], 128, 128, 8
    $region9: #{tpu_custom_call.1} parent=1 // pred_fallthru
      _
    // Predicated region
    $region10: #{tpu_custom_call.1} parent=1 // pred_check
      _
    $region11: #{tpu_custom_call.1} parent=1 // pred_check_branch
      %34 = sbr.rel (0) target = $region13
    $region12: #{tpu_custom_call.1} parent=1 // pred_region
      _
    $region13: #{tpu_custom_call.1} parent=1 // pred_fallthru
      _
    // Predicated region
    $region14: #{tpu_custom_call.1} parent=1 // pred_check
      _
    $region15: #{tpu_custom_call.1} parent=1 // pred_check_branch
      %36 = sbr.rel (0) target = $region17
    $region16: #{tpu_custom_call.1} parent=1 // pred_region
      %37 = dma.done [#allocation3], 128
    $region17: #{tpu_custom_call.1} parent=1 // pred_fallthru
      _
    // Predicated region
    $region18: #{tpu_custom_call.1} parent=1 // pred_check
      _
    $region19: #{tpu_custom_call.1} parent=1 // pred_check_branch
      %39 = sbr.rel (0) target = $region21
    $region20: #{tpu_custom_call.1} parent=1 // pred_region
      %40 = dma.done [#allocation6], 2048
    $region21: #{tpu_custom_call.1} parent=1 // pred_fallthru
      _
    %v41 = vld [vmem:[#allocation2] sm:$0xff]
    %v42 = vld [vmem:[#allocation5] sm:$0xff]
    %v43 = vld [vmem:[#allocation5 + $0x8] sm:$0xff]
    %v44 = vld [vmem:[#allocation5 + $0x10] sm:$0xff]
    %v45 = vld [vmem:[#allocation5 + $0x18] sm:$0xff]
    %v46 = vld [vmem:[#allocation5 + $0x20] sm:$0xff]
    %v47 = vld [vmem:[#allocation5 + $0x28] sm:$0xff]
    %v48 = vld [vmem:[#allocation5 + $0x30] sm:$0xff]
    %v49 = vld [vmem:[#allocation5 + $0x38] sm:$0xff]
    %v50 = vld [vmem:[#allocation5 + $0x40] sm:$0xff]
    %v51 = vld [vmem:[#allocation5 + $0x48] sm:$0xff]
    %v52 = vld [vmem:[#allocation5 + $0x50] sm:$0xff]
    %v53 = vld [vmem:[#allocation5 + $0x58] sm:$0xff]
    %v54 = vld [vmem:[#allocation5 + $0x60] sm:$0xff]
    %v55 = vld [vmem:[#allocation5 + $0x68] sm:$0xff]
    %v56 = vld [vmem:[#allocation5 + $0x70] sm:$0xff]
    %v57 = vld [vmem:[#allocation5 + $0x78] sm:$0xff]
    %58 = vmatprep.subr.mxu0 0.0
    %59 = vmatpush1.xpose.msra.mxu0 %v57
    %60 = vmatprep.subr.mxu0 0.0
    %61 = vmatpush1.xpose.msra.mxu0 %v56
    %62 = vmatprep.subr.mxu0 0.0
    %63 = vmatpush1.xpose.msra.mxu0 %v55
    %64 = vmatprep.subr.mxu0 0.0
    %65 = vmatpush1.xpose.msra.mxu0 %v54
    %66 = vmatprep.subr.mxu0 0.0
    %67 = vmatpush1.xpose.msra.mxu0 %v53
    %68 = vmatprep.subr.mxu0 0.0
    %69 = vmatpush1.xpose.msra.mxu0 %v52
    %70 = vmatprep.subr.mxu0 0.0
    %71 = vmatpush1.xpose.msra.mxu0 %v51
    %72 = vmatprep.subr.mxu0 0.0
    %73 = vmatpush1.xpose.msra.mxu0 %v50
    %74 = vmatprep.subr.mxu0 0.0
    %75 = vmatpush1.xpose.msra.mxu0 %v49
    %76 = vmatprep.subr.mxu0 0.0
    %77 = vmatpush1.xpose.msra.mxu0 %v48
    %78 = vmatprep.subr.mxu0 0.0
    %79 = vmatpush1.xpose.msra.mxu0 %v47
    %80 = vmatprep.subr.mxu0 0.0
    %81 = vmatpush1.xpose.msra.mxu0 %v46
    %82 = vmatprep.subr.mxu0 0.0
    %83 = vmatpush1.xpose.msra.mxu0 %v45
    %84 = vmatprep.subr.mxu0 0.0
    %85 = vmatpush1.xpose.msra.mxu0 %v44
    %86 = vmatprep.subr.mxu0 0.0
    %87 = vmatpush1.xpose.msra.mxu0 %v43
    %88 = vmatprep.subr.mxu0 0.0
    %89 = vmatpush1.xpose.msra.mxu0 %v42
    %90 = vmatprep.subr.mxu0 0.0
    %91 = vmatpush2.xpose.msra.mxu0 0.0
    %92 = vmatprep.subr.mxu0 0.0
    %93 = vmatpush2.xpose.msra.mxu0 0.0
    %94 = vmatprep.subr.mxu0 0.0
    %95 = vmatpush2.xpose.msra.mxu0 0.0
    %96 = vmatprep.subr.mxu0 0.0
    %97 = vmatpush2.xpose.msra.mxu0 0.0
    %98 = vmatprep.subr.mxu0 0.0
    %99 = vmatpush2.xpose.msra.mxu0 0.0
    %100 = vmatprep.subr.mxu0 0.0
    %101 = vmatpush2.xpose.msra.mxu0 0.0
    %102 = vmatprep.subr.mxu0 0.0
    %103 = vmatpush2.xpose.msra.mxu0 0.0
    %104 = vmatprep.subr.mxu0 0.0
    %105 = vmatpush2.xpose.msra.mxu0 0.0
    %106 = vmatprep.subr.mxu0 0.0
    %107 = vmatpush2.xpose.msra.mxu0 0.0
    %108 = vmatprep.subr.mxu0 0.0
    %109 = vmatpush2.xpose.msra.mxu0 0.0
    %110 = vmatprep.subr.mxu0 0.0
    %111 = vmatpush2.xpose.msra.mxu0 0.0
    %112 = vmatprep.subr.mxu0 0.0
    %113 = vmatpush2.xpose.msra.mxu0 0.0
    %114 = vmatprep.subr.mxu0 0.0
    %115 = vmatpush2.xpose.msra.mxu0 0.0
    %116 = vmatprep.subr.mxu0 0.0
    %117 = vmatpush2.xpose.msra.mxu0 0.0
    %118 = vmatprep.subr.mxu0 0.0
    %119 = vmatpush2.xpose.msra.mxu0 0.0
    %120 = vmatprep.subr.mxu0 0.0
    %121 = vmatpush2.xpose.msra.mxu0 0.0
    %122 = vmatprep.mubr.f32.mxu0 0.0
    %123 = vmatmul.mubr.f32.gmra.mxu0 %v41
    %v124 = vpop.f32.mrf.mxu0
    %v125 = vadd.f32 0.0, %v124
    %v126 = vpop.f32.mrf.mxu0
    %127 = vdwg.mxu0
    %p128 = scmp.eq.s32.totalorder 0, 0
    // Predicated region
    $region22: #{tpu_custom_call.1} parent=1 // pred_check
      %p129 = pneg %p128
    $region23: #{tpu_custom_call.1} parent=1 // pred_check_branch
      %131 = sbr.rel (%p129) target = $region25
    $region24: #{tpu_custom_call.1} parent=1 // pred_region
      %132 = vst [vmem:[#allocation7] sm:$0xff] %v125
    $region25: #{tpu_custom_call.1} parent=1 // pred_fallthru
      _
    %p133 = scmp.ne.s32.totalorder 0, 0
    // Predicated region
    $region26: #{tpu_custom_call.1} parent=1 // pred_check
      %p134 = pneg %p133
    $region27: #{tpu_custom_call.1} parent=1 // pred_check_branch
      %136 = sbr.rel (%p134) target = $region29
    $region28: #{tpu_custom_call.1} parent=1 // pred_region
      %v137 = vld [vmem:[#allocation7] sm:$0xff]
      %v138 = vadd.f32 %v137, %v125
      %139 = vst [vmem:[#allocation7] sm:$0xff] %v138
    $region29: #{tpu_custom_call.1} parent=1 // pred_fallthru
      _
    // Predicated region
    $region30: #{tpu_custom_call.1} parent=1 // pred_check
      %p140 = pneg %p128
    $region31: #{tpu_custom_call.1} parent=1 // pred_check_branch
      %142 = sbr.rel (%p140) target = $region33
    $region32: #{tpu_custom_call.1} parent=1 // pred_region
      %v143 = vld [vmem:[#allocation7] sm:$0xff]
      %v144 = vld [vmem:[%s2] sm:$0x1]
      %v146 = vlaneseq
      %v147 = vshrl.u32 %v146, 7
      %v148 = vsub.s32 0, %v147
      %v149 = vrot.slane %v144, %v148
      %v151 = vadd.f32 %v143, %v149
      %v152 = vmax.f32 %v151, 0.0
      %153 = vst [vmem:[#allocation7] sm:$0xff] %v152
    $region33: #{tpu_custom_call.1} parent=1 // pred_fallthru
      _
    // Predicated region
    $region34: #{tpu_custom_call.1} parent=1 // pred_check
      _
    $region35: #{tpu_custom_call.1} parent=1 // pred_check_branch
      %155 = sbr.rel (0) target = $region37
    $region36: #{tpu_custom_call.1} parent=1 // pred_region
      %s157 = ssub.s32 128, 128
      %158 = vsyncadd [#allocation4], %s157
      %s160 = sshll.u32 [#allocation7], 4
      %s161 = int_to_ptr.vmem [resolvable:$true] %s160
      %163 = dma.vmem_to_hbm [thread:$0]  %s161, 128, %s3, [#allocation4]
    $region37: #{tpu_custom_call.1} parent=1 // pred_fallthru
      _
    // Predicated region
    $region38: #{tpu_custom_call.1} parent=1 // pred_check
      _
    $region39: #{tpu_custom_call.1} parent=1 // pred_check_branch
      %165 = sbr.rel (0) target = $region41
    $region40: #{tpu_custom_call.1} parent=1 // pred_region
      %166 = dma.done [#allocation4], 128
    $region41: #{tpu_custom_call.1} parent=1 // pred_fallthru
      _
    %167 = vsyncpa [#allocation3], 1
    %168 = vsyncpa [#allocation6], 1
    %169 = vsyncpa [#allocation4], 1

</llo_original>
